<compile_context>
chip_gen: v6e
topology: v6e:2x2x1
jax: 0.10.0
libtpu: 0.0.40
codegen_flags: <defaults>
</compile_context>

<pallas_src>
import functools

import jax
import jax.numpy as jnp
from jax.experimental import pallas as pl
from jax.experimental.pallas import tpu as pltpu


def _round_up(x, m):
    return (x + m - 1) // m * m


# ----------------------------------------------------------------------- kernels
def _conv_stats_kernel(pt_ref, w_ref, y_ref, stats_ref, acc_ref):
    """Grid step = (batch b, phase ph, spatial tile pj); pj is the inner "arbitrary" axis.

    pt_ref   : [1, 1, F, TP]   bf16  patches^T tile (features x positions)
    w_ref    : [1, Cp, F]      bf16  per-phase weight [C_out, F]
    y_ref    : [1, 1, Cp, TP]  bf16  conv output tile (lane-dense in P)
    stats_ref: [1, 1, Cp, 2]   f32   per-(b, ph) channel (sum, sumsq); written on last pj
    acc_ref  : [Cp, 2]         f32   VMEM accumulator, resident across the pj loop
    """
    pj = pl.program_id(2)

    @pl.when(pj == 0)
    def _():
        acc_ref[...] = jnp.zeros_like(acc_ref)

    y = jnp.dot(w_ref[0], pt_ref[0, 0],
                preferred_element_type=jnp.float32)        # [Cp, TP] f32 (MXU)
    y_ref[0, 0] = y.astype(y_ref.dtype)                    # bf16 intermediate
    # Stats from the f32 MXU result, before the bf16 downcast.
    acc_ref[:, 0:1] += jnp.sum(y, axis=1, keepdims=True)
    acc_ref[:, 1:2] += jnp.sum(y * y, axis=1, keepdims=True)

    @pl.when(pj == pl.num_programs(2) - 1)
    def _():
        stats_ref[0, 0] = acc_ref[...]


def _norm_act_kernel(y_ref, ss_ref, o_ref, *, use_activation):
    """InstanceNorm (affine=False) pre-folded to y*scale + shift, plus optional ReLU.

    y_ref : [1, 1, Cp, TP] bf16   conv tile
    ss_ref: [1, Cp, 2]     f32    per-channel (scale, shift)
    o_ref : [1, 1, Cp, TP] f32    normalized output tile
    """
    y = y_ref[0, 0].astype(jnp.float32)        # [Cp, TP]
    ss = ss_ref[0]                             # [Cp, 2]
    o = y * ss[:, 0:1] + ss[:, 1:2]
    if use_activation:
        o = jnp.maximum(o, 0.0)
    o_ref[0, 0] = o.astype(o_ref.dtype)


# -------------------------------------------------------------------------- glue
def _phase_decompose(x, weight, k, s, p):
    """Sub-pixel decomposition of ConvTranspose2d(k, s, p) on the un-dilated input.

    Phases are enumerated in OUTPUT-OFFSET order (ah, aw), so re-interleaving the
    phase outputs into NCHW is a pure transpose+reshape (no gather permutation).

    Output pixel o = s*j + a reads input i = j + d_a - m with kernel tap q = qa + s*m,
    where qa = (a + p) % s, d_a = (a + p) // s, m in [0, k//s).

    Returns patches [N, s*s, F, P_sub], w [s*s, C_out, F], geometry dict.
    Feature order inside F is (c_in, m_h, m_w); position order in P is (row, col).
    """
    n, c_in, h, w = x.shape
    c_out = weight.shape[1]
    t = k // s
    h_out = (h - 1) * s - 2 * p + k
    w_out = (w - 1) * s - 2 * p + k
    p_h, p_w = h_out // s, w_out // s

    d = [(a + p) // s for a in range(s)]
    qa = [(a + p) % s for a in range(s)]
    lpad = max(0, max((t - 1) - d[a] for a in range(s)))
    rpad_h = max(0, max(d) + p_h - h)
    rpad_w = max(0, max(d) + p_w - w)
    x_p = jnp.pad(x, ((0, 0), (0, 0), (lpad, rpad_h), (lpad, rpad_w)))

    phases = []
    w_phases = []
    for ah in range(s):
        for aw in range(s):
            taps = []
            for th in range(t):
                r0 = lpad + d[ah] - th
                for tw in range(t):
                    c0 = lpad + d[aw] - tw
                    taps.append(x_p[:, :, r0:r0 + p_h, c0:c0 + p_w])
            phases.append(jnp.stack(taps, axis=2))            # [N, C_in, t*t, Ph, Pw]
            wp = weight[:, :, qa[ah]::s, qa[aw]::s]            # [C_in, C_out, t, t]
            w_phases.append(wp.transpose(1, 0, 2, 3).reshape(c_out, c_in * t * t))
    patches = jnp.stack(phases, axis=1)                        # [N, s2, C_in, t*t, Ph, Pw]
    patches = patches.reshape(n, s * s, c_in * t * t, p_h * p_w)
    wt = jnp.stack(w_phases, axis=0)                           # [s2, C_out, F]

    return patches, wt, dict(h_out=h_out, w_out=w_out, p_h=p_h, p_w=p_w)


def _vmem_capacity_bytes():
    try:
        return int(pltpu.get_tpu_info().vmem_capacity_bytes)
    except Exception:
        return 64 * 1024 * 1024        # conservative: v7x per-TensorCore VMEM


def _choose_tile(p_sub, f_pad, cp, vmem_cap):
    """Largest lane tile (multiple of 128) whose double-buffered working set (max of
    the two passes, plus weight / stats / scale-shift blocks) stays within ~1/4 of the
    chip's VMEM (16 MiB on v7x, 32 MiB on v5e/v6e), leaving headroom for the
    surrounding XLA fusions and the second pallas_call."""
    budget = vmem_cap // 4
    # Blocks that do not scale with the lane tile (x2 = double buffered, lane-padded):
    fixed = 2 * (cp * f_pad * 2) + 3 * (cp * 128 * 4)
    # Bytes per lane element (x2 buffers): pass 1 reads bf16 patches + writes bf16 y;
    # pass 2 reads bf16 y + writes f32 out.
    per_tp = 2 * max(f_pad * 2 + cp * 2, cp * 2 + cp * 4)
    cap = 2048
    while cap > 128 and fixed + per_tp * cap > budget:
        cap //= 2
    n_tiles = -(-p_sub // cap)                      # minimize padding waste at this cap
    return max(128, _round_up(-(-p_sub // n_tiles), 128))


@functools.partial(jax.jit, static_argnames=("kernel_size", "stride", "padding",
                                              "use_activation"))
def conv_trans_block(x, weight, bias=None, *, kernel_size, stride, padding,
                     use_activation=True):
    """ConvTranspose2d(k, s, p) -> InstanceNorm2d(affine=False) -> ReLU.

    x      : [N, C_in, H, W]         (NCHW, like PyTorch)
    weight : [C_in, C_out, kH, kW]   (PyTorch ConvTranspose2d layout)
    bias   : [C_out] or None; unused (a per-channel constant is removed exactly by the
             affine=False InstanceNorm that follows).
    returns: [N, C_out, H_out, W_out] float32
    """
    del bias
    k, s, p = kernel_size, stride, padding
    n, c_in, h, w = x.shape
    c_out = weight.shape[1]
    assert weight.shape == (c_in, c_out, k, k)
    assert k % s == 0 and (2 * p) % s == 0, (k, s, p)
    h_out = (h - 1) * s - 2 * p + k
    w_out = (w - 1) * s - 2 * p + k
    assert h_out > 0 and w_out > 0

    # bf16 activations / weights up front: the XLA patch build moves bf16 only, and
    # the MXU accumulates in f32.
    patches, wt, geom = _phase_decompose(x.astype(jnp.bfloat16),
                                         weight.astype(jnp.bfloat16), k, s, p)
    s2 = s * s
    p_h, p_w = geom["p_h"], geom["p_w"]
    p_sub = p_h * p_w
    f_sub = patches.shape[2]

    cp = _round_up(c_out, 8)                 # sublane multiple
    f_pad = _round_up(f_sub, 8)

    vmem_cap = _vmem_capacity_bytes()
    tp = _choose_tile(p_sub, f_pad, cp, vmem_cap)     # lane tile, multiple of 128
    p_pad = _round_up(p_sub, tp)
    npt = p_pad // tp
    vmem_limit = min(vmem_cap // 2, 64 * 1024 * 1024)  # 32 MiB on v7x, 64 MiB on v5e/v6e

    # Zero padding is exact: padded feature columns / P columns give y == 0 and add
    # nothing to the stats (which divide by the true pixel count); padded channel rows
    # are sliced off at the end.
    patches = jnp.pad(patches, ((0, 0), (0, 0), (0, f_pad - f_sub),
                                (0, p_pad - p_sub)))
    wt = jnp.pad(wt, ((0, 0), (0, cp - c_out), (0, f_pad - f_sub)))

    grid = (n, s2, npt)

    # ---- pass 1: conv (as matmul), bf16 tile out + per-(b, ph) channel stats --------
    # pj is the inner reduction-style axis for the stats accumulator -> "arbitrary".
    # b / ph stay "parallel" so v7x's two TensorCores split the work.
    y, stats = pl.pallas_call(
        _conv_stats_kernel,
        out_shape=(
            jax.ShapeDtypeStruct((n, s2, cp, p_pad), jnp.bfloat16),
            jax.ShapeDtypeStruct((n, s2, cp, 2), jnp.float32),
        ),
        grid_spec=pltpu.PrefetchScalarGridSpec(
            num_scalar_prefetch=0,
            grid=grid,
            in_specs=[
                pl.BlockSpec((1, 1, f_pad, tp), lambda b, ph, pj: (b, ph, 0, pj)),
                pl.BlockSpec((1, cp, f_pad), lambda b, ph, pj: (ph, 0, 0)),
            ],
            out_specs=[
                pl.BlockSpec((1, 1, cp, tp), lambda b, ph, pj: (b, ph, 0, pj)),
                pl.BlockSpec((1, 1, cp, 2), lambda b, ph, pj: (b, ph, 0, 0)),
            ],
            scratch_shapes=[pltpu.VMEM((cp, 2), jnp.float32)],
        ),
        compiler_params=pltpu.CompilerParams(
            dimension_semantics=("parallel", "parallel", "arbitrary"),
            vmem_limit_bytes=vmem_limit),
    )(patches, wt)

    # ---- finalize statistics, pre-folded into (scale, shift) (tiny; plain XLA) ------
    count = float(h_out * w_out)
    tot = jnp.sum(stats, axis=1)                       # [N, Cp, 2]  sum over phases
    mean = tot[..., 0] / count                         # [N, Cp]
    var = jnp.maximum(tot[..., 1] / count - mean * mean, 0.0)
    invstd = jax.lax.rsqrt(var + 1e-5)
    ss = jnp.stack([invstd, -mean * invstd], axis=-1)  # [N, Cp, 2]  (scale, shift)

    # ---- pass 2: normalize (one FMA) + ReLU ------------------------------------------
    out_ph = pl.pallas_call(
        functools.partial(_norm_act_kernel, use_activation=use_activation),
        out_shape=jax.ShapeDtypeStruct((n, s2, cp, p_pad), jnp.float32),
        grid_spec=pltpu.PrefetchScalarGridSpec(
            num_scalar_prefetch=0,
            grid=grid,
            in_specs=[
                pl.BlockSpec((1, 1, cp, tp), lambda b, ph, pj: (b, ph, 0, pj)),
                pl.BlockSpec((1, cp, 2), lambda b, ph, pj: (b, 0, 0)),
            ],
            out_specs=pl.BlockSpec((1, 1, cp, tp), lambda b, ph, pj: (b, ph, 0, pj)),
        ),
        compiler_params=pltpu.CompilerParams(
            dimension_semantics=("parallel", "parallel", "parallel"),
            vmem_limit_bytes=vmem_limit),
    )(y, ss)

    # ---- sub-pixel interleave back to NCHW: a single fused XLA transpose -------------
    # Phases are already in output-offset order, so no gather permutation is needed.
    out_ph = out_ph[:, :, :c_out, :p_sub].reshape(n, s, s, c_out, p_h, p_w)
    out = out_ph.transpose(0, 3, 4, 1, 5, 2).reshape(n, c_out, h_out, w_out)
    return out


# --------------------------------------------------------------------- reference
def _reference(x, weight, bias, k, s, p, use_activation=True):
    """Pure-XLA ConvTranspose2d + InstanceNorm2d(affine=False) + ReLU."""
    rhs = jnp.flip(weight, (2, 3)).transpose(1, 0, 2, 3)          # [C_out, C_in, k, k]
    y = jax.lax.conv_general_dilated(
        x, rhs, window_strides=(1, 1),
        padding=[(k - 1 - p, k - 1 - p)] * 2,
        lhs_dilation=(s, s),
        dimension_numbers=("NCHW", "OIHW", "NCHW"))
    y = y + bias.reshape(1, -1, 1, 1)
    mean = y.mean(axis=(2, 3), keepdims=True)
    var = jnp.mean((y - mean) ** 2, axis=(2, 3), keepdims=True)
    y = (y - mean) * jax.lax.rsqrt(var + 1e-5)
    return jnp.maximum(y, 0.0) if use_activation else y


if __name__ == "__main__":
    # ConvTranspose2d(in=4, out=8, kernel_size=4, stride=2, padding=1) doubles H, W.
    N, C_IN, C_OUT, H, W = 2, 4, 8, 16, 16
    K, S, P = 4, 2, 1

    key = jax.random.PRNGKey(0)
    kx, kw, kb = jax.random.split(key, 3)
    x = jax.random.normal(kx, (N, C_IN, H, W), dtype=jnp.float32)
    fan_in = C_IN * K * K
    bound = 1.0 / (fan_in ** 0.5)
    weight = jax.random.uniform(kw, (C_IN, C_OUT, K, K), jnp.float32, -bound, bound)
    bias = jax.random.uniform(kb, (C_OUT,), jnp.float32, -bound, bound)

    out = conv_trans_block(x, weight, bias, kernel_size=K, stride=S, padding=P)
    out = jax.block_until_ready(out)

    assert out.shape == (N, C_OUT, 2 * H, 2 * W), out.shape
    assert bool(jnp.all(jnp.isfinite(out)))
    assert bool(jnp.all(out >= 0.0))        # ReLU output

    # Numerical check vs. a pure-XLA reference (inputs pre-rounded to bf16 so the
    # comparison isolates kernel math from the intentional bf16 operand cast; the
    # tolerance also covers the bf16 rounding of the pass-1 intermediate).
    xb = x.astype(jnp.bfloat16).astype(jnp.float32)
    wb = weight.astype(jnp.bfloat16).astype(jnp.float32)
    ref = _reference(xb, wb, bias, K, S, P)
    err = float(jnp.max(jnp.abs(out - ref)))
    assert err < 4e-2, err

    print("KERNEL_OK")
</pallas_src>

<mosaic_0001>
module attributes {stable_mosaic.version = 11 : i64} {
  func.func @_norm_act_kernel(%arg0: i32, %arg1: i32, %arg2: i32, %arg3: memref<1x1x8x256xbf16, #tpu.memory_space<vmem>>, %arg4: memref<1x8x2xf32, #tpu.memory_space<vmem>>, %arg5: memref<1x1x8x256xf32, #tpu.memory_space<vmem>>) attributes {dimension_semantics = [#tpu.dimension_semantics<parallel>, #tpu.dimension_semantics<parallel>, #tpu.dimension_semantics<parallel>], iteration_bounds = array<i64: 2, 4, 1>, scalar_prefetch = 0 : i64, scratch_operands = 0 : i64, tpu.core_type = #tpu.core_type<tc>, window_params = [{transform_indices = @transform_0, window_bounds = array<i64: 1, 1, 8, 256>}, {transform_indices = @transform_1, window_bounds = array<i64: 1, 8, 2>}, {transform_indices = @transform_2, window_bounds = array<i64: 1, 1, 8, 256>}]} {
    %c0 = arith.constant 0 : index
    %c0_0 = arith.constant 0 : index
    %c0_1 = arith.constant 0 : index
    %c0_2 = arith.constant 0 : index
    %0 = vector.load %arg3[%c0, %c0_0, %c0_1, %c0_2] : memref<1x1x8x256xbf16, #tpu.memory_space<vmem>>, vector<1x1x8x256xbf16>
    %1 = vector.shape_cast %0 : vector<1x1x8x256xbf16> to vector<8x256xbf16>
    %2 = arith.extf %1 : vector<8x256xbf16> to vector<8x256xf32>
    %c0_3 = arith.constant 0 : index
    %c0_4 = arith.constant 0 : index
    %c0_5 = arith.constant 0 : index
    %3 = vector.load %arg4[%c0_3, %c0_4, %c0_5] : memref<1x8x2xf32, #tpu.memory_space<vmem>>, vector<1x8x2xf32>
    %4 = vector.shape_cast %3 : vector<1x8x2xf32> to vector<8x2xf32>
    %5 = vector.extract_strided_slice %4 {offsets = [0, 0], sizes = [8, 1], strides = [1, 1]} : vector<8x2xf32> to vector<8x1xf32>
    %6 = vector.broadcast %5 : vector<8x1xf32> to vector<8x256xf32>
    %7 = arith.mulf %2, %6 : vector<8x256xf32>
    %8 = vector.extract_strided_slice %4 {offsets = [0, 1], sizes = [8, 1], strides = [1, 1]} : vector<8x2xf32> to vector<8x1xf32>
    %9 = vector.broadcast %8 : vector<8x1xf32> to vector<8x256xf32>
    %10 = arith.addf %7, %9 : vector<8x256xf32>
    %cst = arith.constant 0.000000e+00 : f32
    %11 = vector.broadcast %cst : f32 to vector<8x256xf32>
    %12 = arith.maximumf %10, %11 : vector<8x256xf32>
    %c0_6 = arith.constant 0 : index
    %c0_7 = arith.constant 0 : index
    %c0_8 = arith.constant 0 : index
    %c0_9 = arith.constant 0 : index
    %13 = vector.load %arg5[%c0_6, %c0_7, %c0_8, %c0_9] : memref<1x1x8x256xf32, #tpu.memory_space<vmem>>, vector<1x1x8x256xf32>
    %14 = vector.shape_cast %13 : vector<1x1x8x256xf32> to vector<8x256xf32>
    %15 = vector.shape_cast %12 : vector<8x256xf32> to vector<1x1x8x256xf32>
    tpu.vector_store %arg5[%c0_6, %c0_7, %c0_8, %c0_9], %15 {strides = array<i32>} : memref<1x1x8x256xf32, #tpu.memory_space<vmem>>, vector<1x1x8x256xf32>,
    return
  }
  func.func @transform_0(%arg0: i32, %arg1: i32, %arg2: i32) -> (i32, i32, i32, i32) {
    %c0_i32 = arith.constant 0 : i32
    %c0_i32_0 = arith.constant 0 : i32
    return %arg0, %arg1, %c0_i32, %arg2 : i32, i32, i32, i32
  }
  func.func @transform_1(%arg0: i32, %arg1: i32, %arg2: i32) -> (i32, i32, i32) {
    %c0_i32 = arith.constant 0 : i32
    %c0_i32_0 = arith.constant 0 : i32
    %c0_i32_1 = arith.constant 0 : i32
    return %arg0, %c0_i32, %c0_i32_0 : i32, i32, i32
  }
  func.func @transform_2(%arg0: i32, %arg1: i32, %arg2: i32) -> (i32, i32, i32, i32) {
    %c0_i32 = arith.constant 0 : i32
    %c0_i32_0 = arith.constant 0 : i32
    return %arg0, %arg1, %c0_i32, %arg2 : i32, i32, i32, i32
  }
}

module attributes {stable_mosaic.version = 11 : i64} {
  func.func @_conv_stats_kernel(%arg0: i32, %arg1: i32, %arg2: i32, %arg3: memref<1x1x16x256xbf16, #tpu.memory_space<vmem>>, %arg4: memref<1x8x16xbf16, #tpu.memory_space<vmem>>, %arg5: memref<1x1x8x256xbf16, #tpu.memory_space<vmem>>, %arg6: memref<1x1x8x2xf32, #tpu.memory_space<vmem>>, %arg7: memref<8x2xf32, #tpu.memory_space<vmem>>) attributes {dimension_semantics = [#tpu.dimension_semantics<parallel>, #tpu.dimension_semantics<parallel>, #tpu.dimension_semantics<arbitrary>], iteration_bounds = array<i64: 2, 4, 1>, scalar_prefetch = 0 : i64, scratch_operands = 1 : i64, tpu.core_type = #tpu.core_type<tc>, window_params = [{transform_indices = @transform_0, window_bounds = array<i64: 1, 1, 16, 256>}, {transform_indices = @transform_1, window_bounds = array<i64: 1, 8, 16>}, {transform_indices = @transform_2, window_bounds = array<i64: 1, 1, 8, 256>}, {transform_indices = @transform_3, window_bounds = array<i64: 1, 1, 8, 2>}]} {
    %c0_i32 = arith.constant 0 : i32
    %0 = arith.cmpi eq, %arg2, %c0_i32 : i32
    %1 = arith.extui %0 : i1 to i32
    %c0_i32_0 = arith.constant 0 : i32
    %2 = arith.cmpi ne, %1, %c0_i32_0 : i32
    scf.if %2 {
      %cst_22 = arith.constant 0.000000e+00 : f32
      %26 = vector.broadcast %cst_22 : f32 to vector<8x2xf32>
      %c0_23 = arith.constant 0 : index
      %c0_24 = arith.constant 0 : index
      %27 = vector.load %arg7[%c0_23, %c0_24] : memref<8x2xf32, #tpu.memory_space<vmem>>, vector<8x2xf32>
      tpu.vector_store %arg7[%c0_23, %c0_24], %26 {strides = array<i32>} : memref<8x2xf32, #tpu.memory_space<vmem>>, vector<8x2xf32>,
    } else {
    }
    %c0 = arith.constant 0 : index
    %c0_1 = arith.constant 0 : index
    %c0_2 = arith.constant 0 : index
    %3 = vector.load %arg4[%c0, %c0_1, %c0_2] : memref<1x8x16xbf16, #tpu.memory_space<vmem>>, vector<1x8x16xbf16>
    %4 = vector.shape_cast %3 : vector<1x8x16xbf16> to vector<8x16xbf16>
    %c0_3 = arith.constant 0 : index
    %c0_4 = arith.constant 0 : index
    %c0_5 = arith.constant 0 : index
    %c0_6 = arith.constant 0 : index
    %5 = vector.load %arg3[%c0_3, %c0_4, %c0_5, %c0_6] : memref<1x1x16x256xbf16, #tpu.memory_space<vmem>>, vector<1x1x16x256xbf16>
    %6 = vector.shape_cast %5 : vector<1x1x16x256xbf16> to vector<16x256xbf16>
    %cst = arith.constant dense<0.000000e+00> : vector<8x256xf32>
    %7 = tpu.matmul %4, %6, %cst {dimension_numbers = #tpu.dot_dimension_numbers<[1], [0], [0], [1], [0, 0, 1, 1], [], []>} : vector<8x16xbf16>, vector<16x256xbf16>, vector<8x256xf32> -> vector<8x256xf32>
    %8 = arith.truncf %7 : vector<8x256xf32> to vector<8x256xbf16>
    %c0_7 = arith.constant 0 : index
    %c0_8 = arith.constant 0 : index
    %c0_9 = arith.constant 0 : index
    %c0_10 = arith.constant 0 : index
    %9 = vector.load %arg5[%c0_7, %c0_8, %c0_9, %c0_10] : memref<1x1x8x256xbf16, #tpu.memory_space<vmem>>, vector<1x1x8x256xbf16>
    %10 = vector.shape_cast %9 : vector<1x1x8x256xbf16> to vector<8x256xbf16>
    %11 = vector.shape_cast %8 : vector<8x256xbf16> to vector<1x1x8x256xbf16>
    tpu.vector_store %arg5[%c0_7, %c0_8, %c0_9, %c0_10], %11 {strides = array<i32>} : memref<1x1x8x256xbf16, #tpu.memory_space<vmem>>, vector<1x1x8x256xbf16>,
    %c0_11 = arith.constant 0 : index
    %c0_12 = arith.constant 0 : index
    %12 = vector.load %arg7[%c0_11, %c0_12] : memref<8x2xf32, #tpu.memory_space<vmem>>, vector<8x1xf32>
    %cst_13 = arith.constant dense<0.000000e+00> : vector<8xf32>
    %13 = vector.multi_reduction <add>, %7, %cst_13 [1] : vector<8x256xf32> to vector<8xf32>
    %14 = vector.shape_cast %13 : vector<8xf32> to vector<8x1xf32>
    %15 = arith.addf %12, %14 : vector<8x1xf32>
    %c0_14 = arith.constant 0 : index
    %c0_15 = arith.constant 0 : index
    %16 = vector.load %arg7[%c0_14, %c0_15] : memref<8x2xf32, #tpu.memory_space<vmem>>, vector<8x1xf32>
    tpu.vector_store %arg7[%c0_14, %c0_15], %15 {strides = array<i32>} : memref<8x2xf32, #tpu.memory_space<vmem>>, vector<8x1xf32>,
    %c0_16 = arith.constant 0 : index
    %c1 = arith.constant 1 : index
    %17 = vector.load %arg7[%c0_16, %c1] : memref<8x2xf32, #tpu.memory_space<vmem>>, vector<8x1xf32>
    %18 = arith.mulf %7, %7 : vector<8x256xf32>
    %cst_17 = arith.constant dense<0.000000e+00> : vector<8xf32>
    %19 = vector.multi_reduction <add>, %18, %cst_17 [1] : vector<8x256xf32> to vector<8xf32>
    %20 = vector.shape_cast %19 : vector<8xf32> to vector<8x1xf32>
    %21 = arith.addf %17, %20 : vector<8x1xf32>
    %c0_18 = arith.constant 0 : index
    %c1_19 = arith.constant 1 : index
    %22 = vector.load %arg7[%c0_18, %c1_19] : memref<8x2xf32, #tpu.memory_space<vmem>>, vector<8x1xf32>
    tpu.vector_store %arg7[%c0_18, %c1_19], %21 {strides = array<i32>} : memref<8x2xf32, #tpu.memory_space<vmem>>, vector<8x1xf32>,
    %c0_i32_20 = arith.constant 0 : i32
    %23 = arith.cmpi eq, %arg2, %c0_i32_20 : i32
    %24 = arith.extui %23 : i1 to i32
    %c0_i32_21 = arith.constant 0 : i32
    %25 = arith.cmpi ne, %24, %c0_i32_21 : i32
    scf.if %25 {
      %c0_22 = arith.constant 0 : index
      %c0_23 = arith.constant 0 : index
      %26 = vector.load %arg7[%c0_22, %c0_23] : memref<8x2xf32, #tpu.memory_space<vmem>>, vector<8x2xf32>
      %c0_24 = arith.constant 0 : index
      %c0_25 = arith.constant 0 : index
      %c0_26 = arith.constant 0 : index
      %c0_27 = arith.constant 0 : index
      %27 = vector.load %arg6[%c0_24, %c0_25, %c0_26, %c0_27] : memref<1x1x8x2xf32, #tpu.memory_space<vmem>>, vector<1x1x8x2xf32>
      %28 = vector.shape_cast %27 : vector<1x1x8x2xf32> to vector<8x2xf32>
      %29 = vector.shape_cast %26 : vector<8x2xf32> to vector<1x1x8x2xf32>
      tpu.vector_store %arg6[%c0_24, %c0_25, %c0_26, %c0_27], %29 {strides = array<i32>} : memref<1x1x8x2xf32, #tpu.memory_space<vmem>>, vector<1x1x8x2xf32>,
    } else {
    }
    return
  }
  func.func @transform_0(%arg0: i32, %arg1: i32, %arg2: i32) -> (i32, i32, i32, i32) {
    %c0_i32 = arith.constant 0 : i32
    %c0_i32_0 = arith.constant 0 : i32
    return %arg0, %arg1, %c0_i32, %arg2 : i32, i32, i32, i32
  }
  func.func @transform_1(%arg0: i32, %arg1: i32, %arg2: i32) -> (i32, i32, i32) {
    %c0_i32 = arith.constant 0 : i32
    %c0_i32_0 = arith.constant 0 : i32
    %c0_i32_1 = arith.constant 0 : i32
    return %arg1, %c0_i32, %c0_i32_0 : i32, i32, i32
  }
  func.func @transform_2(%arg0: i32, %arg1: i32, %arg2: i32) -> (i32, i32, i32, i32) {
    %c0_i32 = arith.constant 0 : i32
    %c0_i32_0 = arith.constant 0 : i32
    return %arg0, %arg1, %c0_i32, %arg2 : i32, i32, i32, i32
  }
  func.func @transform_3(%arg0: i32, %arg1: i32, %arg2: i32) -> (i32, i32, i32, i32) {
    %c0_i32 = arith.constant 0 : i32
    %c0_i32_0 = arith.constant 0 : i32
    %c0_i32_1 = arith.constant 0 : i32
    return %arg0, %arg1, %c0_i32, %c0_i32_0 : i32, i32, i32, i32
  }
}

</mosaic_0001>

<llo_original>
// kernel: conv_trans_block.2
$region0: #{conv_trans_block.2}
  #allocation0 [shape = 'u32[]', space=smem, size = 0x4, offset = 0x4, fixed_abs, tag = 'smem constant byte address 0x4 - core index']
  #allocation1 [shape = 'u32[144,128]{1,0:T(1,128)}', space=vmem, size = 0x12000, scoped, tag = 'internal scratch']
  #allocation2 [shape = 'f32[8,2]{1,0:T(8,128)}', space=vmem, size = 0x1000, scoped, tag = 'scratch operand']
  %s0 = inlined_call_operand.vmem [shape: bf16[2,4,16,256], index: 0, kind: input, shape index: {}]
  %s1 = inlined_call_operand.vmem [shape: bf16[4,8,16], index: 1, kind: input, shape index: {}]
  %s2 = inlined_call_operand.vmem [shape: bf16[2,4,8,256], index: 2, kind: output, shape index: {0}]
  %s3 = inlined_call_operand.vmem [shape: f32[2,4,8,2], index: 3, kind: output, shape index: {1}]
  %4 = xla_tuple %s2, %s3
  %s5 = sld [smem:[#allocation0]]
  $region57: #{conv_trans_block.2} parent=0
    _
  %s7 = ssub.s32 1, %s5
  %s8 = scalar_select 0, %s7, %s5
  loop: start=0, step=1, limit=10
  $region2: #{conv_trans_block.2} parent=0 // loop_pre_header
    _
  $region3: #{conv_trans_block.2} parent=0 // loop_header
    %s10 = sphi 0, %s14
    %p11 = scmp.ge.s32.totalorder %s10, 10
    %s17 = sphi 0, %s36
    %s18 = sphi 0, %s32
    %s19 = sphi 0, %s28
    %s20 = sphi 0, %s17
    %s21 = sphi 0, %s18
    %s22 = sphi 0, %s19
    %s23 = sphi 0, %s20
    %s24 = sphi 0, %s21
    %s25 = sphi 0, %s22
    %s43 = sphi 0, %s45
    %s46 = sphi 0, %s43
    %s47 = sphi 0, %s46
    %s63 = sphi 0, %s47
    %s69 = sphi 0, %s71
    %s72 = sphi 0, %s69
    %s73 = sphi 0, %s72
    %s89 = sphi 0, %s73
    %s99 = sphi 0, %s101
    %s102 = sphi 0, %s99
    %s103 = sphi 0, %s102
    %s119 = sphi 0, %s103
    %s127 = sphi 0, %s129
    %s130 = sphi 0, %s127
    %s131 = sphi 0, %s130
    %s147 = sphi 0, %s131
  $region4: #{conv_trans_block.2} parent=0 // loop_header_branch
    %13 = sbr.rel (%p11) target = $region8
  $region5: #{conv_trans_block.2} parent=0 // loop_body
    %s15 = ssub.s32 %s10, 1
    %s16 = ssub.s32 %s10, 2
    %s26 = sadd.s32 1, %s19
    %p27 = scmp.ge.s32.totalorder %s26, 1
    %s28 = scalar_select %p27, 0, %s26
    %s29 = sadd.s32 1, %s18
    %s30 = scalar_select %p27, %s29, %s18
    %p31 = scmp.ge.s32.totalorder %s30, 4
    %s32 = scalar_select %p31, 0, %s30
    %s33 = sadd.s32 1, %s17
    %s34 = scalar_select %p31, %s33, %s17
    %p35 = scmp.ge.s32.totalorder %s34, 2
    %s36 = scalar_select %p35, 0, %s34
    %s37 = ssub.s32 %s17, %s36
    %s38 = ssub.s32 %s18, %s32
    %s39 = sor.u32 %s37, %s38
    %s40 = ssub.s32 %s19, %s28
    %s41 = sor.u32 %s39, %s40
    %p42 = scmp.eq.s32.totalorder %s41, 0
    %s44 = sadd.s32 %s43, 1
    %s45 = scalar_select %p42, %s43, %s44
    %p48 = pneg %p42
    %p49 = scmp.eq.s32.totalorder %s10, 7
    %p50 = por %p48, %p49
    %p51 = scmp.ne.s32.totalorder %s43, %s46
    %p52 = scmp.eq.s32.totalorder %s10, 0
    %p53 = por %p51, %p52
    %p54 = scmp.ne.s32.totalorder %s43, %s46
    %p55 = scmp.eq.s32.totalorder %s15, 7
    %p56 = por %p54, %p55
    %p57 = scmp.ne.s32.totalorder %s46, %s47
    %p58 = scmp.eq.s32.totalorder %s15, 0
    %p59 = por %p57, %p58
    %p60 = scmp.ne.s32.totalorder %s46, %s47
    %p61 = scmp.eq.s32.totalorder %s16, 7
    %p62 = por %p60, %p61
    %p64 = scmp.ne.s32.totalorder %s47, %s63
    %p65 = scmp.eq.s32.totalorder %s16, 0
    %p66 = por %p64, %p65
    %s67 = ssub.s32 %s18, %s32
    %p68 = scmp.eq.s32.totalorder %s67, 0
    %s70 = sadd.s32 %s69, 1
    %s71 = scalar_select %p68, %s69, %s70
    %p74 = pneg %p68
    %p75 = scmp.eq.s32.totalorder %s10, 7
    %p76 = por %p74, %p75
    %p77 = scmp.ne.s32.totalorder %s69, %s72
    %p78 = scmp.eq.s32.totalorder %s10, 0
    %p79 = por %p77, %p78
    %p80 = scmp.ne.s32.totalorder %s69, %s72
    %p81 = scmp.eq.s32.totalorder %s15, 7
    %p82 = por %p80, %p81
    %p83 = scmp.ne.s32.totalorder %s72, %s73
    %p84 = scmp.eq.s32.totalorder %s15, 0
    %p85 = por %p83, %p84
    %p86 = scmp.ne.s32.totalorder %s72, %s73
    %p87 = scmp.eq.s32.totalorder %s16, 7
    %p88 = por %p86, %p87
    %p90 = scmp.ne.s32.totalorder %s73, %s89
    %p91 = scmp.eq.s32.totalorder %s16, 0
    %p92 = por %p90, %p91
    %s93 = ssub.s32 %s17, %s36
    %s94 = ssub.s32 %s18, %s32
    %s95 = sor.u32 %s93, %s94
    %s96 = ssub.s32 %s19, %s28
    %s97 = sor.u32 %s95, %s96
    %p98 = scmp.eq.s32.totalorder %s97, 0
    %s100 = sadd.s32 %s99, 1
    %s101 = scalar_select %p98, %s99, %s100
    %p104 = pneg %p98
    %p105 = scmp.eq.s32.totalorder %s10, 7
    %p106 = por %p104, %p105
    %p107 = scmp.ne.s32.totalorder %s99, %s102
    %p108 = scmp.eq.s32.totalorder %s10, 0
    %p109 = por %p107, %p108
    %p110 = scmp.ne.s32.totalorder %s99, %s102
    %p111 = scmp.eq.s32.totalorder %s15, 7
    %p112 = por %p110, %p111
    %p113 = scmp.ne.s32.totalorder %s102, %s103
    %p114 = scmp.eq.s32.totalorder %s15, 0
    %p115 = por %p113, %p114
    %p116 = scmp.ne.s32.totalorder %s102, %s103
    %p117 = scmp.eq.s32.totalorder %s16, 7
    %p118 = por %p116, %p117
    %p120 = scmp.ne.s32.totalorder %s103, %s119
    %p121 = scmp.eq.s32.totalorder %s16, 0
    %p122 = por %p120, %p121
    %s123 = ssub.s32 %s17, %s36
    %s124 = ssub.s32 %s18, %s32
    %s125 = sor.u32 %s123, %s124
    %p126 = scmp.eq.s32.totalorder %s125, 0
    %s128 = sadd.s32 %s127, 1
    %s129 = scalar_select %p126, %s127, %s128
    %p132 = pneg %p126
    %p133 = scmp.eq.s32.totalorder %s10, 7
    %p134 = por %p132, %p133
    %p135 = scmp.ne.s32.totalorder %s127, %s130
    %p136 = scmp.eq.s32.totalorder %s10, 0
    %p137 = por %p135, %p136
    %p138 = scmp.ne.s32.totalorder %s127, %s130
    %p139 = scmp.eq.s32.totalorder %s15, 7
    %p140 = por %p138, %p139
    %p141 = scmp.ne.s32.totalorder %s130, %s131
    %p142 = scmp.eq.s32.totalorder %s15, 0
    %p143 = por %p141, %p142
    %p144 = scmp.ne.s32.totalorder %s130, %s131
    %p145 = scmp.eq.s32.totalorder %s16, 7
    %p146 = por %p144, %p145
    %p148 = scmp.ne.s32.totalorder %s131, %s147
    %p149 = scmp.eq.s32.totalorder %s16, 0
    %p150 = por %p148, %p149
    %p151 = scmp.le.s32.totalorder 1, %s10
    %p152 = scmp.lt.s32.totalorder %s10, 9
    %p153 = pnand %p151, %p152
    %p154 = pneg %p153
    // Predicated region
    $region9: #{conv_trans_block.2} parent=5 // pred_check
      _
    $region10: #{conv_trans_block.2} parent=5 // pred_check_branch
      %156 = sbr.rel (%p153) target = $region12
    $region11: #{conv_trans_block.2} parent=5 // pred_region
      %s157 = ssub.s32 %s10, 1
    $region12: #{conv_trans_block.2} parent=5 // pred_fallthru
      _
    %p158 = scmp.lt.s32.totalorder %s10, 8
    // Predicated region
    $region13: #{conv_trans_block.2} parent=5 // pred_check
      %p159 = pneg %p158
    $region14: #{conv_trans_block.2} parent=5 // pred_check_branch
      %161 = sbr.rel (%p159) target = $region16
    $region15: #{conv_trans_block.2} parent=5 // pred_region
      // Predicated region
      $region17: #{conv_trans_block.2} parent=15 // pred_check
        %p162 = pneg %p53
      $region18: #{conv_trans_block.2} parent=15 // pred_check_branch
        %164 = sbr.rel (%p162) target = $region20
      $region19: #{conv_trans_block.2} parent=15 // pred_region
        %s165 = smul.u32 2, %s19
        %p166 = scmp.lt.s32.totalorder %s17, 1
        %s167 = scalar_select %p166, %s17, 1
        %p168 = scmp.lt.s32.totalorder %s18, 3
        %s169 = scalar_select %p168, %s18, 3
        %p170 = scmp.lt.s32.totalorder %s165, 1
        %s171 = scalar_select %p170, %s165, 1
        %s172 = smul.addr %s169, 4
        %s173 = sadd.s32 %s171, %s172
        %s174 = smul.addr %s167, 16
        %s175 = sadd.s32 %s173, %s174
        %s176 = smul.addr %s175, 4
        %s177 = scalar_lea.vmem %s0, %s176
        %s178 = smul.u32 2, %s19
      $region20: #{conv_trans_block.2} parent=15 // pred_fallthru
        _
      // Predicated region
      $region21: #{conv_trans_block.2} parent=15 // pred_check
        %p179 = pneg %p79
      $region22: #{conv_trans_block.2} parent=15 // pred_check_branch
        %181 = sbr.rel (%p179) target = $region24
      $region23: #{conv_trans_block.2} parent=15 // pred_region
        %p182 = scmp.lt.s32.totalorder %s18, 3
        %s183 = scalar_select %p182, %s18, 3
        %s184 = smul.addr %s183, 4
        %s185 = scalar_lea.vmem %s1, %s184
      $region24: #{conv_trans_block.2} parent=15 // pred_fallthru
        _
    $region16: #{conv_trans_block.2} parent=5 // pred_fallthru
      _
    %p186 = scmp.le.s32.totalorder 1, %s10
    %p187 = scmp.lt.s32.totalorder %s10, 9
    %p188 = pnand %p186, %p187
    %p189 = pneg %p188
    // Predicated region
    $region25: #{conv_trans_block.2} parent=5 // pred_check
      _
    $region26: #{conv_trans_block.2} parent=5 // pred_check_branch
      %191 = sbr.rel (%p188) target = $region28
    $region27: #{conv_trans_block.2} parent=5 // pred_region
      %s192 = ssub.s32 %s10, 1
      %s193 = smul.u32 2, %s22
      %p194 = scmp.lt.s32.totalorder %s20, 1
      %s195 = scalar_select %p194, %s20, 1
      %p196 = scmp.lt.s32.totalorder %s21, 3
      %s197 = scalar_select %p196, %s21, 3
      %p198 = scmp.lt.s32.totalorder %s193, 1
      %s199 = scalar_select %p198, %s193, 1
      %s200 = smul.addr %s197, 4
      %s201 = sadd.s32 %s199, %s200
      %s202 = smul.addr %s195, 16
      %s203 = sadd.s32 %s201, %s202
      %s204 = smul.addr %s203, 4
      %s205 = scalar_lea.vmem %s0, %s204
      %p206 = pneg %p59
      %p207 = pneg %p56
      %p208 = scmp.lt.s32.totalorder %s21, 3
      %s209 = scalar_select %p208, %s21, 3
      %s210 = smul.addr %s209, 4
      %s211 = scalar_lea.vmem %s1, %s210
      %p212 = pneg %p85
      %p213 = pneg %p82
      %p214 = pneg %p115
      %p215 = pneg %p112
      %s216 = smul.u32 2, %s22
      %p217 = scmp.lt.s32.totalorder %s20, 1
      %s218 = scalar_select %p217, %s20, 1
      %p219 = scmp.lt.s32.totalorder %s21, 3
      %s220 = scalar_select %p219, %s21, 3
      %p221 = scmp.lt.s32.totalorder %s216, 1
      %s222 = scalar_select %p221, %s216, 1
      %s223 = smul.addr %s220, 2
      %s224 = sadd.s32 %s222, %s223
      %s225 = smul.addr %s218, 8
      %s226 = sadd.s32 %s224, %s225
      %s227 = smul.addr %s226, 4
      %s228 = scalar_lea.vmem %s2, %s227
      %p229 = pneg %p143
      %p230 = pneg %p140
      %p231 = scmp.lt.s32.totalorder %s20, 1
      %s232 = scalar_select %p231, %s20, 1
      %p233 = scmp.lt.s32.totalorder %s21, 3
      %s234 = scalar_select %p233, %s21, 3
      %s235 = smul.addr %s232, 4
      %s236 = sadd.s32 %s234, %s235
      %s237 = smul.addr %s236, 8
      %s238 = scalar_lea.vmem %s3, %s237
      %s239 = smul.u32 2, %s22
      %p240 = scmp.lt.s32.totalorder %s20, 1
      %s241 = scalar_select %p240, %s20, 1
      %p242 = scmp.lt.s32.totalorder %s21, 3
      %s243 = scalar_select %p242, %s21, 3
      %p244 = scmp.lt.s32.totalorder %s239, 1
      %s245 = scalar_select %p244, %s239, 1
      %s246 = smul.addr %s243, 4
      %s247 = sadd.s32 %s245, %s246
      %s248 = smul.addr %s241, 16
      %s249 = sadd.s32 %s247, %s248
      %s250 = smul.addr %s249, 4
      %s251 = scalar_lea.vmem %s0, %s250
      %s252 = smul.u32 2, %s22
      %p253 = scmp.lt.s32.totalorder %s21, 3
      %s254 = scalar_select %p253, %s21, 3
      %s255 = smul.addr %s254, 4
      %s256 = scalar_lea.vmem %s1, %s255
      %s257 = smul.u32 2, %s22
      %p258 = scmp.lt.s32.totalorder %s20, 1
      %s259 = scalar_select %p258, %s20, 1
      %p260 = scmp.lt.s32.totalorder %s21, 3
      %s261 = scalar_select %p260, %s21, 3
      %p262 = scmp.lt.s32.totalorder %s257, 1
      %s263 = scalar_select %p262, %s257, 1
      %s264 = smul.addr %s261, 2
      %s265 = sadd.s32 %s263, %s264
      %s266 = smul.addr %s259, 8
      %s267 = sadd.s32 %s265, %s266
      %s268 = smul.addr %s267, 4
      %s269 = scalar_lea.vmem %s2, %s268
      %s270 = smul.u32 2, %s22
      %p271 = scmp.lt.s32.totalorder %s20, 1
      %s272 = scalar_select %p271, %s20, 1
      %p273 = scmp.lt.s32.totalorder %s21, 3
      %s274 = scalar_select %p273, %s21, 3
      %s275 = smul.addr %s272, 4
      %s276 = sadd.s32 %s274, %s275
      %s277 = smul.addr %s276, 8
      %s278 = scalar_lea.vmem %s3, %s277
      %p280 = scmp.eq.s32.totalorder %s22, 0
      // Predicated region
      $region29: #{conv_trans_block.2} parent=27 // pred_check
        %p281 = pneg %p280
      $region30: #{conv_trans_block.2} parent=27 // pred_check_branch
        %283 = sbr.rel (%p281) target = $region32
      $region31: #{conv_trans_block.2} parent=27 // pred_region
        %vm284 = vcmask 15360
        %285 = vst.msk [vmem:[#allocation2] sm:$0xff] %vm284, 0.0
      $region32: #{conv_trans_block.2} parent=27 // pred_fallthru
        _
      %v286 = vld [vmem:[%s256] sm:$0xf]
      %v287 = vld [vmem:[%s251] sm:$0xff]
      %v288 = vld [vmem:[%s251 + $0x8] sm:$0xff]
      %v291 = vunpack.c.l.b16 %v287
      %v292 = vunpack.c.h.b16 %v287
      %v293 = vunpack.c.l.b16 %v288
      %v294 = vunpack.c.h.b16 %v288
      %v295 = vpack.c.b16 %v293, %v291
      %v296 = vpack.c.b16 %v294, %v292
      %vm299 = vcmask 130048
      %v301 = vsel %vm299, %v286, 0
      %303 = vmatprep.subr.bf16.mxu0 0
      %304 = vmatpush1.bf16.msra.mxu0 0
      %305 = vmatprep.subr.bf16.mxu0 0
      %306 = vmatpush1.bf16.msra.mxu0 0
      %307 = vmatprep.subr.bf16.mxu0 0
      %308 = vmatpush1.bf16.msra.mxu0 0
      %309 = vmatprep.subr.bf16.mxu0 0
      %310 = vmatpush1.bf16.msra.mxu0 0
      %311 = vmatprep.subr.bf16.mxu0 0
      %312 = vmatpush1.bf16.msra.mxu0 0
      %313 = vmatprep.subr.bf16.mxu0 0
      %314 = vmatpush1.bf16.msra.mxu0 0
      %315 = vmatprep.subr.bf16.mxu0 0
      %316 = vmatpush1.bf16.msra.mxu0 0
      %317 = vmatprep.subr.bf16.mxu0 %v296
      %318 = vmatpush1.bf16.msra.mxu0 %v295
      %319 = vmatprep.subr.bf16.mxu0 0
      %320 = vmatpush2.bf16.msra.mxu0 0
      %321 = vmatprep.subr.bf16.mxu0 0
      %322 = vmatpush2.bf16.msra.mxu0 0
      %323 = vmatprep.subr.bf16.mxu0 0
      %324 = vmatpush2.bf16.msra.mxu0 0
      %325 = vmatprep.subr.bf16.mxu0 0
      %326 = vmatpush2.bf16.msra.mxu0 0
      %327 = vmatprep.subr.bf16.mxu0 0
      %328 = vmatpush2.bf16.msra.mxu0 0
      %329 = vmatprep.subr.bf16.mxu0 0
      %330 = vmatpush2.bf16.msra.mxu0 0
      %331 = vmatprep.subr.bf16.mxu0 0
      %332 = vmatpush2.bf16.msra.mxu0 0
      %333 = vmatprep.subr.bf16.mxu0 0
      %334 = vmatpush2.bf16.msra.mxu0 0
      %335 = vmatprep.mubr.bf16.mxu0 0
      %336 = vmatmul.mubr.bf16.gmra.mxu0 %v301
      %v337 = vpop.f32.mrf.mxu0
      %v338 = vadd.f32 0.0, %v337
      %v339 = vpop.f32.mrf.mxu0
      %v340 = vadd.f32 0.0, %v339
      %v341 = vpop.f32.mrf.mxu0
      %v342 = vpop.f32.mrf.mxu0
      %343 = vdwg.mxu0
      %v344 = vpack.c.bf16 %v338, %v338
      %v345 = vpack.c.bf16 %v340, %v340
      %v348 = vunpack.c.l.b16 %v344
      %v349 = vunpack.c.l.b16 %v345
      %v350 = vpack.c.b16 %v349, %v348
      %352 = vst [vmem:[%s269] sm:$0xff] %v350
      %v353 = vld [vmem:[#allocation2] sm:$0xff]
      %v354 = vadd.f32 %v338, %v340
      %355 = vadd.xlane.f32.xlu0 %v354
      %v356 = vpop.xlane.xlu0 %355
      %v357 = vadd.f32 %v353, %v356
      %vm358 = vcmask 7168
      %359 = vst.msk [vmem:[#allocation2] sm:$0xff] %vm358, %v357
      %v360 = vld [vmem:[#allocation2] sm:$0xff]
      %v361 = vmul.f32 %v338, %v338
      %v362 = vmul.f32 %v340, %v340
      %v363 = vadd.f32 %v361, %v362
      %364 = vadd.xlane.f32.xlu0 %v363
      %v365 = vpop.xlane.xlu0 %364
      %v366 = vadd.f32 %v360, %v365
      %vm367 = vcmask 15368
      %368 = vst.msk [vmem:[#allocation2] sm:$0xff] %vm367, %v366
      // Predicated region
      $region33: #{conv_trans_block.2} parent=27 // pred_check
        %p369 = pneg %p280
      $region34: #{conv_trans_block.2} parent=27 // pred_check_branch
        %371 = sbr.rel (%p369) target = $region36
      $region35: #{conv_trans_block.2} parent=27 // pred_region
        %v372 = vld [vmem:[#allocation2] sm:$0xff]
        %vm373 = vcmask 15360
        %374 = vst.msk [vmem:[%s278] sm:$0xff] %vm373, %v372
      $region36: #{conv_trans_block.2} parent=27 // pred_fallthru
        _
      %s375 = smul.u32 2, %s22
      %p376 = scmp.lt.s32.totalorder %s20, 1
      %s377 = scalar_select %p376, %s20, 1
      %p378 = scmp.lt.s32.totalorder %s21, 3
      %s379 = scalar_select %p378, %s21, 3
      %p380 = scmp.lt.s32.totalorder %s375, 1
      %s381 = scalar_select %p380, %s375, 1
      %s382 = smul.addr %s379, 2
      %s383 = sadd.s32 %s381, %s382
      %s384 = smul.addr %s377, 8
      %s385 = sadd.s32 %s383, %s384
      %s386 = smul.addr %s385, 4
      %s387 = scalar_lea.vmem %s2, %s386
      %p388 = scmp.lt.s32.totalorder %s20, 1
      %s389 = scalar_select %p388, %s20, 1
      %p390 = scmp.lt.s32.totalorder %s21, 3
      %s391 = scalar_select %p390, %s21, 3
      %s392 = smul.addr %s389, 4
      %s393 = sadd.s32 %s391, %s392
      %s394 = smul.addr %s393, 8
      %s395 = scalar_lea.vmem %s3, %s394
      // Predicated region
      $region37: #{conv_trans_block.2} parent=27 // pred_check
        %p396 = pneg %p112
      $region38: #{conv_trans_block.2} parent=27 // pred_check_branch
        %398 = sbr.rel (%p396) target = $region40
      $region39: #{conv_trans_block.2} parent=27 // pred_region
        %s399 = smul.u32 2, %s22
      $region40: #{conv_trans_block.2} parent=27 // pred_fallthru
        _
      // Predicated region
      $region41: #{conv_trans_block.2} parent=27 // pred_check
        %p400 = pneg %p140
      $region42: #{conv_trans_block.2} parent=27 // pred_check_branch
        %402 = sbr.rel (%p400) target = $region44
      $region43: #{conv_trans_block.2} parent=27 // pred_region
        _
      $region44: #{conv_trans_block.2} parent=27 // pred_fallthru
        _
    $region28: #{conv_trans_block.2} parent=5 // pred_fallthru
      _
    %p403 = scmp.le.s32.totalorder 2, %s10
    // Predicated region
    $region45: #{conv_trans_block.2} parent=5 // pred_check
      %p404 = pneg %p403
    $region46: #{conv_trans_block.2} parent=5 // pred_check_branch
      %406 = sbr.rel (%p404) target = $region48
    $region47: #{conv_trans_block.2} parent=5 // pred_region
      %s407 = ssub.s32 %s10, 2
      // Predicated region
      $region49: #{conv_trans_block.2} parent=47 // pred_check
        %p408 = pneg %p118
      $region50: #{conv_trans_block.2} parent=47 // pred_check_branch
        %410 = sbr.rel (%p408) target = $region52
      $region51: #{conv_trans_block.2} parent=47 // pred_region
        %s411 = smul.u32 2, %s25
        %p412 = scmp.lt.s32.totalorder %s23, 1
        %s413 = scalar_select %p412, %s23, 1
        %p414 = scmp.lt.s32.totalorder %s24, 3
        %s415 = scalar_select %p414, %s24, 3
        %p416 = scmp.lt.s32.totalorder %s411, 1
        %s417 = scalar_select %p416, %s411, 1
        %s418 = smul.addr %s415, 2
        %s419 = sadd.s32 %s417, %s418
        %s420 = smul.addr %s413, 8
        %s421 = sadd.s32 %s419, %s420
        %s422 = smul.addr %s421, 4
        %s423 = scalar_lea.vmem %s2, %s422
      $region52: #{conv_trans_block.2} parent=47 // pred_fallthru
        _
      // Predicated region
      $region53: #{conv_trans_block.2} parent=47 // pred_check
        %p424 = pneg %p146
      $region54: #{conv_trans_block.2} parent=47 // pred_check_branch
        %426 = sbr.rel (%p424) target = $region56
      $region55: #{conv_trans_block.2} parent=47 // pred_region
        %p427 = scmp.lt.s32.totalorder %s23, 1
        %s428 = scalar_select %p427, %s23, 1
        %p429 = scmp.lt.s32.totalorder %s24, 3
        %s430 = scalar_select %p429, %s24, 3
        %s431 = smul.addr %s428, 4
        %s432 = sadd.s32 %s430, %s431
        %s433 = smul.addr %s432, 8
        %s434 = scalar_lea.vmem %s3, %s433
      $region56: #{conv_trans_block.2} parent=47 // pred_fallthru
        _
    $region48: #{conv_trans_block.2} parent=5 // pred_fallthru
      _
  $region6: #{conv_trans_block.2} parent=0 // loop_footer
    %s14 = sadd.s32 1, %s10
  $region7: #{conv_trans_block.2} parent=0 // loop_footer_branch
    %9 = sbr.rel target = $region3
  $region8: #{conv_trans_block.2} parent=0 // loop_exit
    _

// kernel: conv_trans_block.3
$region0: #{conv_trans_block.3}
  #allocation0 [shape = 'u32[]', space=smem, size = 0x4, offset = 0x4, fixed_abs, tag = 'smem constant byte address 0x4 - core index']
  #allocation1 [shape = 'u32[144,128]{1,0:T(1,128)}', space=vmem, size = 0x12000, scoped, tag = 'internal scratch']
  %s0 = inlined_call_operand.vmem [shape: bf16[2,4,8,256], index: 0, kind: input, shape index: {}]
  %s1 = inlined_call_operand.vmem [shape: f32[2,8,2], index: 1, kind: input, shape index: {}]
  %s2 = inlined_call_operand.vmem [shape: f32[2,4,8,256], index: 2, kind: output, shape index: {}]
  %s3 = sld [smem:[#allocation0]]
  $region41: #{conv_trans_block.3} parent=0
    _
  %s5 = ssub.s32 1, %s3
  %s6 = scalar_select 0, %s5, %s3
  loop: start=0, step=1, limit=10
  $region2: #{conv_trans_block.3} parent=0 // loop_pre_header
    _
  $region3: #{conv_trans_block.3} parent=0 // loop_header
    %s8 = sphi 0, %s12
    %p9 = scmp.ge.s32.totalorder %s8, 10
    %s15 = sphi 0, %s34
    %s16 = sphi 0, %s30
    %s17 = sphi 0, %s26
    %s18 = sphi 0, %s15
    %s19 = sphi 0, %s16
    %s20 = sphi 0, %s17
    %s21 = sphi 0, %s18
    %s22 = sphi 0, %s19
    %s23 = sphi 0, %s20
    %s41 = sphi 0, %s43
    %s44 = sphi 0, %s41
    %s45 = sphi 0, %s44
    %s61 = sphi 0, %s45
    %s67 = sphi 0, %s69
    %s70 = sphi 0, %s67
    %s71 = sphi 0, %s70
    %s87 = sphi 0, %s71
    %s97 = sphi 0, %s99
    %s100 = sphi 0, %s97
    %s101 = sphi 0, %s100
    %s117 = sphi 0, %s101
  $region4: #{conv_trans_block.3} parent=0 // loop_header_branch
    %11 = sbr.rel (%p9) target = $region8
  $region5: #{conv_trans_block.3} parent=0 // loop_body
    %s13 = ssub.s32 %s8, 1
    %s14 = ssub.s32 %s8, 2
    %s24 = sadd.s32 1, %s17
    %p25 = scmp.ge.s32.totalorder %s24, 1
    %s26 = scalar_select %p25, 0, %s24
    %s27 = sadd.s32 1, %s16
    %s28 = scalar_select %p25, %s27, %s16
    %p29 = scmp.ge.s32.totalorder %s28, 4
    %s30 = scalar_select %p29, 0, %s28
    %s31 = sadd.s32 1, %s15
    %s32 = scalar_select %p29, %s31, %s15
    %p33 = scmp.ge.s32.totalorder %s32, 2
    %s34 = scalar_select %p33, 0, %s32
    %s35 = ssub.s32 %s15, %s34
    %s36 = ssub.s32 %s16, %s30
    %s37 = sor.u32 %s35, %s36
    %s38 = ssub.s32 %s17, %s26
    %s39 = sor.u32 %s37, %s38
    %p40 = scmp.eq.s32.totalorder %s39, 0
    %s42 = sadd.s32 %s41, 1
    %s43 = scalar_select %p40, %s41, %s42
    %p46 = pneg %p40
    %p47 = scmp.eq.s32.totalorder %s8, 7
    %p48 = por %p46, %p47
    %p49 = scmp.ne.s32.totalorder %s41, %s44
    %p50 = scmp.eq.s32.totalorder %s8, 0
    %p51 = por %p49, %p50
    %p52 = scmp.ne.s32.totalorder %s41, %s44
    %p53 = scmp.eq.s32.totalorder %s13, 7
    %p54 = por %p52, %p53
    %p55 = scmp.ne.s32.totalorder %s44, %s45
    %p56 = scmp.eq.s32.totalorder %s13, 0
    %p57 = por %p55, %p56
    %p58 = scmp.ne.s32.totalorder %s44, %s45
    %p59 = scmp.eq.s32.totalorder %s14, 7
    %p60 = por %p58, %p59
    %p62 = scmp.ne.s32.totalorder %s45, %s61
    %p63 = scmp.eq.s32.totalorder %s14, 0
    %p64 = por %p62, %p63
    %s65 = ssub.s32 %s15, %s34
    %p66 = scmp.eq.s32.totalorder %s65, 0
    %s68 = sadd.s32 %s67, 1
    %s69 = scalar_select %p66, %s67, %s68
    %p72 = pneg %p66
    %p73 = scmp.eq.s32.totalorder %s8, 7
    %p74 = por %p72, %p73
    %p75 = scmp.ne.s32.totalorder %s67, %s70
    %p76 = scmp.eq.s32.totalorder %s8, 0
    %p77 = por %p75, %p76
    %p78 = scmp.ne.s32.totalorder %s67, %s70
    %p79 = scmp.eq.s32.totalorder %s13, 7
    %p80 = por %p78, %p79
    %p81 = scmp.ne.s32.totalorder %s70, %s71
    %p82 = scmp.eq.s32.totalorder %s13, 0
    %p83 = por %p81, %p82
    %p84 = scmp.ne.s32.totalorder %s70, %s71
    %p85 = scmp.eq.s32.totalorder %s14, 7
    %p86 = por %p84, %p85
    %p88 = scmp.ne.s32.totalorder %s71, %s87
    %p89 = scmp.eq.s32.totalorder %s14, 0
    %p90 = por %p88, %p89
    %s91 = ssub.s32 %s15, %s34
    %s92 = ssub.s32 %s16, %s30
    %s93 = sor.u32 %s91, %s92
    %s94 = ssub.s32 %s17, %s26
    %s95 = sor.u32 %s93, %s94
    %p96 = scmp.eq.s32.totalorder %s95, 0
    %s98 = sadd.s32 %s97, 1
    %s99 = scalar_select %p96, %s97, %s98
    %p102 = pneg %p96
    %p103 = scmp.eq.s32.totalorder %s8, 7
    %p104 = por %p102, %p103
    %p105 = scmp.ne.s32.totalorder %s97, %s100
    %p106 = scmp.eq.s32.totalorder %s8, 0
    %p107 = por %p105, %p106
    %p108 = scmp.ne.s32.totalorder %s97, %s100
    %p109 = scmp.eq.s32.totalorder %s13, 7
    %p110 = por %p108, %p109
    %p111 = scmp.ne.s32.totalorder %s100, %s101
    %p112 = scmp.eq.s32.totalorder %s13, 0
    %p113 = por %p111, %p112
    %p114 = scmp.ne.s32.totalorder %s100, %s101
    %p115 = scmp.eq.s32.totalorder %s14, 7
    %p116 = por %p114, %p115
    %p118 = scmp.ne.s32.totalorder %s101, %s117
    %p119 = scmp.eq.s32.totalorder %s14, 0
    %p120 = por %p118, %p119
    %p121 = scmp.le.s32.totalorder 1, %s8
    %p122 = scmp.lt.s32.totalorder %s8, 9
    %p123 = pnand %p121, %p122
    %p124 = pneg %p123
    // Predicated region
    $region9: #{conv_trans_block.3} parent=5 // pred_check
      _
    $region10: #{conv_trans_block.3} parent=5 // pred_check_branch
      %126 = sbr.rel (%p123) target = $region12
    $region11: #{conv_trans_block.3} parent=5 // pred_region
      %s127 = ssub.s32 %s8, 1
    $region12: #{conv_trans_block.3} parent=5 // pred_fallthru
      _
    %p128 = scmp.lt.s32.totalorder %s8, 8
    // Predicated region
    $region13: #{conv_trans_block.3} parent=5 // pred_check
      %p129 = pneg %p128
    $region14: #{conv_trans_block.3} parent=5 // pred_check_branch
      %131 = sbr.rel (%p129) target = $region16
    $region15: #{conv_trans_block.3} parent=5 // pred_region
      // Predicated region
      $region17: #{conv_trans_block.3} parent=15 // pred_check
        %p132 = pneg %p51
      $region18: #{conv_trans_block.3} parent=15 // pred_check_branch
        %134 = sbr.rel (%p132) target = $region20
      $region19: #{conv_trans_block.3} parent=15 // pred_region
        %s135 = smul.u32 2, %s17
        %p136 = scmp.lt.s32.totalorder %s15, 1
        %s137 = scalar_select %p136, %s15, 1
        %p138 = scmp.lt.s32.totalorder %s16, 3
        %s139 = scalar_select %p138, %s16, 3
        %p140 = scmp.lt.s32.totalorder %s135, 1
        %s141 = scalar_select %p140, %s135, 1
        %s142 = smul.addr %s139, 2
        %s143 = sadd.s32 %s141, %s142
        %s144 = smul.addr %s137, 8
        %s145 = sadd.s32 %s143, %s144
        %s146 = smul.addr %s145, 4
        %s147 = scalar_lea.vmem %s0, %s146
        %s148 = smul.u32 2, %s17
      $region20: #{conv_trans_block.3} parent=15 // pred_fallthru
        _
      // Predicated region
      $region21: #{conv_trans_block.3} parent=15 // pred_check
        %p149 = pneg %p77
      $region22: #{conv_trans_block.3} parent=15 // pred_check_branch
        %151 = sbr.rel (%p149) target = $region24
      $region23: #{conv_trans_block.3} parent=15 // pred_region
        %p152 = scmp.lt.s32.totalorder %s15, 1
        %s153 = scalar_select %p152, %s15, 1
        %s154 = smul.addr %s153, 8
        %s155 = scalar_lea.vmem %s1, %s154
      $region24: #{conv_trans_block.3} parent=15 // pred_fallthru
        _
    $region16: #{conv_trans_block.3} parent=5 // pred_fallthru
      _
    %p156 = scmp.le.s32.totalorder 1, %s8
    %p157 = scmp.lt.s32.totalorder %s8, 9
    %p158 = pnand %p156, %p157
    %p159 = pneg %p158
    // Predicated region
    $region25: #{conv_trans_block.3} parent=5 // pred_check
      _
    $region26: #{conv_trans_block.3} parent=5 // pred_check_branch
      %161 = sbr.rel (%p158) target = $region28
    $region27: #{conv_trans_block.3} parent=5 // pred_region
      %s162 = ssub.s32 %s8, 1
      %s163 = smul.u32 2, %s20
      %p164 = scmp.lt.s32.totalorder %s18, 1
      %s165 = scalar_select %p164, %s18, 1
      %p166 = scmp.lt.s32.totalorder %s19, 3
      %s167 = scalar_select %p166, %s19, 3
      %p168 = scmp.lt.s32.totalorder %s163, 1
      %s169 = scalar_select %p168, %s163, 1
      %s170 = smul.addr %s167, 2
      %s171 = sadd.s32 %s169, %s170
      %s172 = smul.addr %s165, 8
      %s173 = sadd.s32 %s171, %s172
      %s174 = smul.addr %s173, 4
      %s175 = scalar_lea.vmem %s0, %s174
      %p176 = pneg %p57
      %p177 = pneg %p54
      %p178 = scmp.lt.s32.totalorder %s18, 1
      %s179 = scalar_select %p178, %s18, 1
      %s180 = smul.addr %s179, 8
      %s181 = scalar_lea.vmem %s1, %s180
      %p182 = pneg %p83
      %p183 = pneg %p80
      %p184 = pneg %p113
      %p185 = pneg %p110
      %s186 = smul.u32 2, %s20
      %p187 = scmp.lt.s32.totalorder %s18, 1
      %s188 = scalar_select %p187, %s18, 1
      %p189 = scmp.lt.s32.totalorder %s19, 3
      %s190 = scalar_select %p189, %s19, 3
      %p191 = scmp.lt.s32.totalorder %s186, 1
      %s192 = scalar_select %p191, %s186, 1
      %s193 = smul.addr %s190, 2
      %s194 = sadd.s32 %s192, %s193
      %s195 = smul.addr %s188, 8
      %s196 = sadd.s32 %s194, %s195
      %s197 = smul.addr %s196, 8
      %s198 = scalar_lea.vmem %s2, %s197
      %s199 = smul.u32 2, %s20
      %p200 = scmp.lt.s32.totalorder %s18, 1
      %s201 = scalar_select %p200, %s18, 1
      %p202 = scmp.lt.s32.totalorder %s19, 3
      %s203 = scalar_select %p202, %s19, 3
      %p204 = scmp.lt.s32.totalorder %s199, 1
      %s205 = scalar_select %p204, %s199, 1
      %s206 = smul.addr %s203, 2
      %s207 = sadd.s32 %s205, %s206
      %s208 = smul.addr %s201, 8
      %s209 = sadd.s32 %s207, %s208
      %s210 = smul.addr %s209, 4
      %s211 = scalar_lea.vmem %s0, %s210
      %s212 = smul.u32 2, %s20
      %p213 = scmp.lt.s32.totalorder %s18, 1
      %s214 = scalar_select %p213, %s18, 1
      %s215 = smul.addr %s214, 8
      %s216 = scalar_lea.vmem %s1, %s215
      %s217 = smul.u32 2, %s20
      %p218 = scmp.lt.s32.totalorder %s18, 1
      %s219 = scalar_select %p218, %s18, 1
      %p220 = scmp.lt.s32.totalorder %s19, 3
      %s221 = scalar_select %p220, %s19, 3
      %p222 = scmp.lt.s32.totalorder %s217, 1
      %s223 = scalar_select %p222, %s217, 1
      %s224 = smul.addr %s221, 2
      %s225 = sadd.s32 %s223, %s224
      %s226 = smul.addr %s219, 8
      %s227 = sadd.s32 %s225, %s226
      %s228 = smul.addr %s227, 8
      %s229 = scalar_lea.vmem %s2, %s228
      %s230 = smul.u32 2, %s20
      %v231 = vld [vmem:[%s211] sm:$0xff]
      %v232 = vunpack.c.l.bf16 %v231
      %v233 = vunpack.c.h.bf16 %v231
      %v234 = vld [vmem:[%s216] sm:$0xff]
      %236 = vset.pattern.permute.xlu0 0
      %237 = vperm.xlu0 %236, %v234
      %v238 = vpop.permute.xlu0 %237
      %v240 = vmul.f32 %v232, %v238
      %v241 = vmul.f32 %v233, %v238
      %242 = vset.pattern.permute.xlu0 1
      %243 = vperm.xlu0 %242, %v234
      %v244 = vpop.permute.xlu0 %243
      %v246 = vadd.f32 %v240, %v244
      %v247 = vadd.f32 %v241, %v244
      %v248 = vmax.f32 %v246, 0.0
      %v249 = vmax.f32 %v247, 0.0
      %250 = vst [vmem:[%s229] sm:$0xff] %v248
      %251 = vst [vmem:[%s229 + $0x8] sm:$0xff] %v249
      %s252 = smul.u32 2, %s20
      %p253 = scmp.lt.s32.totalorder %s18, 1
      %s254 = scalar_select %p253, %s18, 1
      %p255 = scmp.lt.s32.totalorder %s19, 3
      %s256 = scalar_select %p255, %s19, 3
      %p257 = scmp.lt.s32.totalorder %s252, 1
      %s258 = scalar_select %p257, %s252, 1
      %s259 = smul.addr %s256, 2
      %s260 = sadd.s32 %s258, %s259
      %s261 = smul.addr %s254, 8
      %s262 = sadd.s32 %s260, %s261
      %s263 = smul.addr %s262, 8
      %s264 = scalar_lea.vmem %s2, %s263
      // Predicated region
      $region29: #{conv_trans_block.3} parent=27 // pred_check
        %p265 = pneg %p110
      $region30: #{conv_trans_block.3} parent=27 // pred_check_branch
        %267 = sbr.rel (%p265) target = $region32
      $region31: #{conv_trans_block.3} parent=27 // pred_region
        %s268 = smul.u32 2, %s20
      $region32: #{conv_trans_block.3} parent=27 // pred_fallthru
        _
    $region28: #{conv_trans_block.3} parent=5 // pred_fallthru
      _
    %p269 = scmp.le.s32.totalorder 2, %s8
    // Predicated region
    $region33: #{conv_trans_block.3} parent=5 // pred_check
      %p270 = pneg %p269
    $region34: #{conv_trans_block.3} parent=5 // pred_check_branch
      %272 = sbr.rel (%p270) target = $region36
    $region35: #{conv_trans_block.3} parent=5 // pred_region
      %s273 = ssub.s32 %s8, 2
      // Predicated region
      $region37: #{conv_trans_block.3} parent=35 // pred_check
        %p274 = pneg %p116
      $region38: #{conv_trans_block.3} parent=35 // pred_check_branch
        %276 = sbr.rel (%p274) target = $region40
      $region39: #{conv_trans_block.3} parent=35 // pred_region
        %s277 = smul.u32 2, %s23
        %p278 = scmp.lt.s32.totalorder %s21, 1
        %s279 = scalar_select %p278, %s21, 1
        %p280 = scmp.lt.s32.totalorder %s22, 3
        %s281 = scalar_select %p280, %s22, 3
        %p282 = scmp.lt.s32.totalorder %s277, 1
        %s283 = scalar_select %p282, %s277, 1
        %s284 = smul.addr %s281, 2
        %s285 = sadd.s32 %s283, %s284
        %s286 = smul.addr %s279, 8
        %s287 = sadd.s32 %s285, %s286
        %s288 = smul.addr %s287, 8
        %s289 = scalar_lea.vmem %s2, %s288
      $region40: #{conv_trans_block.3} parent=35 // pred_fallthru
        _
    $region36: #{conv_trans_block.3} parent=5 // pred_fallthru
      _
  $region6: #{conv_trans_block.3} parent=0 // loop_footer
    %s12 = sadd.s32 1, %s8
  $region7: #{conv_trans_block.3} parent=0 // loop_footer_branch
    %7 = sbr.rel target = $region3
  $region8: #{conv_trans_block.3} parent=0 // loop_exit
    _

</llo_original>
